<compile_context>
chip_gen: v7x
topology: tpu7x:2x2x1
jax: 0.10.0
libtpu: 0.0.40
codegen_flags: <defaults>
</compile_context>

<pallas_src>
import math

import jax
import jax.numpy as jnp
from jax.experimental import pallas as pl
from jax.experimental.pallas import tpu as pltpu


def _round_up(x, m):
    return ((x + m - 1) // m) * m


def _pick_tile_n(hp):
    """Largest gate-column tile in {512, 256, 128} that divides Hp."""
    for cand in (512, 256, 128):
        if hp % cand == 0:
            return min(cand, hp)
    return 128


def _stacked_gru_kernel(x_ref, h0_ref, wr_ref, wz_ref, wxn_ref, whn_ref, b_ref,
                        h1_ref, xh_ref, hbuf_ref):
    """Grid = (layer, gate-column tile); layer axis outermost & sequential.

    xh_ref  : (Bp, Kp+Hp) bf16 scratch slab holding [layer input | h0[layer]].
    hbuf_ref: (Bp, Hp)    bf16 scratch holding the current layer's h_new
              (copied into the slab at the start of the next layer, so tiles
              of one layer never overwrite the input they are still reading).
    """
    layer = pl.program_id(0)
    t = pl.program_id(1)

    Kp = wxn_ref.shape[0]            # padded input-feature width of the slab
    Hp = whn_ref.shape[0]            # padded hidden size (multiple of 128)
    TN = whn_ref.shape[1]            # gate-column tile width (multiple of 128)
    col = pl.multiple_of(t * TN, 128)

    # --- per-layer setup (first column tile only) ---------------------------
    @pl.when((t == 0) & (layer == 0))
    def _():
        xh_ref[:, :Kp] = x_ref[...]                        # padded bf16 input

    @pl.when((t == 0) & (layer > 0))
    def _():
        xh_ref[:, :Hp] = hbuf_ref[...]                     # previous layer out

    @pl.when(t == 0)
    def _():
        xh_ref[:, Kp:] = h0_ref[...].astype(xh_ref.dtype)  # h0 of this layer

    # --- gate pre-activations for this column tile --------------------------
    # (bf16 MXU inputs, f32 accumulation; r/z biases pre-folded host-side.)
    xh = xh_ref[...]                                       # (Bp, Kc) bf16
    g_r = jnp.dot(xh, wr_ref[...],
                  preferred_element_type=jnp.float32) + b_ref[0:1, :]
    g_z = jnp.dot(xh, wz_ref[...],
                  preferred_element_type=jnp.float32) + b_ref[1:2, :]
    g_xn = jnp.dot(xh_ref[:, :Kp], wxn_ref[...],
                   preferred_element_type=jnp.float32) + b_ref[2:3, :]
    g_hn = jnp.dot(xh_ref[:, Kp:], whn_ref[...],
                   preferred_element_type=jnp.float32) + b_ref[3:4, :]

    # --- gate math in f32 (lane-aligned: col and TN are multiples of 128) ---
    r = jax.nn.sigmoid(g_r)
    z = jax.nn.sigmoid(g_z)
    n_gate = jnp.tanh(g_xn + r * g_hn)
    h_prev = h0_ref[:, pl.ds(col, TN)]                     # f32 slice of h0[l]
    h_new = (1.0 - z) * n_gate + z * h_prev

    h1_ref[...] = h_new.astype(h1_ref.dtype)               # lane-dense store
    hbuf_ref[:, pl.ds(col, TN)] = h_new.astype(hbuf_ref.dtype)


def stacked_gru_forward(x, h0, w_r, w_z, w_xn, w_hn, b_all, *, tile_n=None):
    """x: (B, I) f32, h0: (L, B, H) f32 -> (out (B, H), h1 (L, B, H))."""
    B, I = x.shape
    L, _, H = h0.shape
    Kc, Hp = w_r.shape[1], w_r.shape[2]
    Kp = Kc - Hp
    Bp = max(8, _round_up(B, 8))

    TN = tile_n if tile_n is not None else _pick_tile_n(Hp)
    assert Hp % TN == 0 and TN % 128 == 0
    NT = Hp // TN

    # Pad batch to >= 8 sublanes, features/hidden to 128-lane multiples.
    x_p = jnp.zeros((Bp, Kp), jnp.bfloat16).at[:B, :I].set(x.astype(jnp.bfloat16))
    h0_p = jnp.zeros((L, Bp, Hp), jnp.float32).at[:, :B, :H].set(h0)

    # Explicit VMEM budget: double-buffered per-(layer, tile) blocks + scratch.
    blk = (2 * Kc * TN + Kp * TN + Hp * TN) * 2            # bf16 weight tiles
    blk += 8 * TN * 4                                       # bias tile (padded)
    blk += Bp * Hp * 4 + Bp * TN * 4 + Bp * Kp * 2          # h0 / out / x blocks
    est = 2 * blk + Bp * (Kc + Hp) * 2                      # 2x-buffer + scratch
    vmem_limit = int(min(100 * (1 << 20), max(16 * (1 << 20), 2 * est)))

    h1_p = pl.pallas_call(
        _stacked_gru_kernel,
        out_shape=jax.ShapeDtypeStruct((L, Bp, Hp), jnp.float32),
        grid_spec=pltpu.PrefetchScalarGridSpec(
            num_scalar_prefetch=0,
            grid=(L, NT),
            in_specs=[
                pl.BlockSpec((Bp, Kp), lambda l, t: (0, 0)),            # x (resident)
                pl.BlockSpec((None, Bp, Hp), lambda l, t: (l, 0, 0)),   # h0[l]
                pl.BlockSpec((None, Kc, TN), lambda l, t: (l, 0, t)),   # W_r[l]
                pl.BlockSpec((None, Kc, TN), lambda l, t: (l, 0, t)),   # W_z[l]
                pl.BlockSpec((None, Kp, TN), lambda l, t: (l, 0, t)),   # W_xn[l]
                pl.BlockSpec((None, Hp, TN), lambda l, t: (l, 0, t)),   # W_hn[l]
                pl.BlockSpec((None, 4, TN), lambda l, t: (l, 0, t)),    # biases[l]
            ],
            out_specs=pl.BlockSpec((None, Bp, TN), lambda l, t: (l, 0, t)),
            scratch_shapes=[
                pltpu.VMEM((Bp, Kc), jnp.bfloat16),   # [layer input | h0] slab
                pltpu.VMEM((Bp, Hp), jnp.bfloat16),   # current layer's h_new
            ],
        ),
        compiler_params=pltpu.CompilerParams(
            dimension_semantics=("arbitrary", "arbitrary"),  # both sequential
            vmem_limit_bytes=vmem_limit,
        ),
    )(x_p, h0_p, w_r, w_z, w_xn, w_hn, b_all)

    h1 = h1_p[:, :B, :H]
    return h1[-1], h1


class StackedGRUPallas:
    """JAX/Pallas port of the PyTorch StackedGRU module (eval-mode forward)."""

    def __init__(self, num_layers, input_size, hidden_size, dropout, key):
        self.num_layers = num_layers
        self.input_size = input_size
        self.hidden_size = hidden_size
        self.dropout = dropout  # identity in eval mode

        H = hidden_size
        Hp = _round_up(H, 128)
        Kp = max(_round_up(input_size, 128), Hp)
        Kc = Kp + Hp
        self.H_pad, self.K_pad = Hp, Kp

        bound = 1.0 / math.sqrt(hidden_size)
        torch_params = []
        w_r, w_z, w_xn, w_hn, b_all = [], [], [], [], []
        in_size = input_size
        for _ in range(num_layers):
            key, k1, k2, k3, k4 = jax.random.split(key, 5)
            # PyTorch GRUCell params: weight_ih (3H, in), weight_hh (3H, H),
            # biases (3H,), all uniform(-1/sqrt(H), 1/sqrt(H)); gate order [r|z|n].
            w_ih = jax.random.uniform(k1, (3 * H, in_size), jnp.float32, -bound, bound)
            w_hh = jax.random.uniform(k2, (3 * H, H), jnp.float32, -bound, bound)
            bi = jax.random.uniform(k3, (3 * H,), jnp.float32, -bound, bound)
            bh = jax.random.uniform(k4, (3 * H,), jnp.float32, -bound, bound)
            torch_params.append((w_ih, w_hh, bi, bh))

            wi_t, wh_t = w_ih.T, w_hh.T          # (in, 3H), (H, 3H)

            wr = (jnp.zeros((Kc, Hp), jnp.float32)
                  .at[:in_size, :H].set(wi_t[:, 0:H])
                  .at[Kp:Kp + H, :H].set(wh_t[:, 0:H]))
            wz = (jnp.zeros((Kc, Hp), jnp.float32)
                  .at[:in_size, :H].set(wi_t[:, H:2 * H])
                  .at[Kp:Kp + H, :H].set(wh_t[:, H:2 * H]))
            wxn = (jnp.zeros((Kp, Hp), jnp.float32)
                   .at[:in_size, :H].set(wi_t[:, 2 * H:3 * H]))
            whn = (jnp.zeros((Hp, Hp), jnp.float32)
                   .at[:H, :H].set(wh_t[:, 2 * H:3 * H]))

            ba = (jnp.zeros((4, Hp), jnp.float32)
                  .at[0, :H].set(bi[0:H] + bh[0:H])              # r (folded)
                  .at[1, :H].set(bi[H:2 * H] + bh[H:2 * H])      # z (folded)
                  .at[2, :H].set(bi[2 * H:3 * H])                # n, input part
                  .at[3, :H].set(bh[2 * H:3 * H]))               # n, hidden part

            w_r.append(wr); w_z.append(wz); w_xn.append(wxn); w_hn.append(whn)
            b_all.append(ba)
            in_size = hidden_size

        self.torch_params = torch_params                     # f32 (reference)
        self.w_r = jnp.stack(w_r).astype(jnp.bfloat16)       # (L, Kc, Hp)
        self.w_z = jnp.stack(w_z).astype(jnp.bfloat16)       # (L, Kc, Hp)
        self.w_xn = jnp.stack(w_xn).astype(jnp.bfloat16)     # (L, Kp, Hp)
        self.w_hn = jnp.stack(w_hn).astype(jnp.bfloat16)     # (L, Hp, Hp)
        self.b_all = jnp.stack(b_all)                        # (L, 4, Hp) f32

    def __call__(self, x, hidden, tile_n=None):
        # x: (B, input_size); hidden: (num_layers, B, hidden_size)
        return stacked_gru_forward(x, hidden, self.w_r, self.w_z, self.w_xn,
                                   self.w_hn, self.b_all, tile_n=tile_n)


def _reference_forward(model, x, h0):
    """Pure-JAX reference with the same numerics (bf16 matmul in, f32 math)."""
    H = model.hidden_size
    inp = x
    h_1 = []
    for i, (w_ih, w_hh, bi, bh) in enumerate(model.torch_params):
        wi = w_ih.T.astype(jnp.bfloat16)
        wh = w_hh.T.astype(jnp.bfloat16)
        h = h0[i]
        gi = jnp.dot(inp.astype(jnp.bfloat16), wi,
                     preferred_element_type=jnp.float32) + bi
        gh = jnp.dot(h.astype(jnp.bfloat16), wh,
                     preferred_element_type=jnp.float32) + bh
        r = jax.nn.sigmoid(gi[:, :H] + gh[:, :H])
        z = jax.nn.sigmoid(gi[:, H:2 * H] + gh[:, H:2 * H])
        n = jnp.tanh(gi[:, 2 * H:] + r * gh[:, 2 * H:])
        inp = (1.0 - z) * n + z * h
        h_1.append(inp)
    return inp, jnp.stack(h_1)


if __name__ == "__main__":
    key = jax.random.PRNGKey(0)

    # (num_layers, input_size, hidden_size, batch, forced gate-column tile)
    configs = [
        (2, 32, 32, 2, None),     # original toy config
        (3, 200, 96, 5, None),    # input > hidden, H % 128 != 0, B % 8 != 0
        (2, 48, 160, 3, 128),     # Hp = 256 forced into two 128-wide gate tiles
    ]

    for (L, I, H, B, tn) in configs:
        key, kx, kh, kp = jax.random.split(key, 4)
        x = jax.random.normal(kx, (B, I), jnp.float32)
        h0 = jax.random.normal(kh, (L, B, H), jnp.float32)

        model = StackedGRUPallas(L, I, H, dropout=0.0, key=kp)

        out, h1 = model(x, h0, tile_n=tn)
        out = jax.block_until_ready(out)
        h1 = jax.block_until_ready(h1)

        ref_out, ref_h1 = _reference_forward(model, x, h0)
        assert out.shape == (B, H)
        assert h1.shape == (L, B, H)
        # bf16 weights / matmul inputs -> loosened tolerance vs. the reference.
        assert jnp.allclose(out, ref_out, atol=5e-3, rtol=5e-3), (L, I, H, B)
        assert jnp.allclose(h1, ref_h1, atol=5e-3, rtol=5e-3), (L, I, H, B)

    print("KERNEL_OK")
</pallas_src>

<mosaic_0001>
module attributes {stable_mosaic.version = 11 : i64} {
  func.func @_stacked_gru_kernel(%arg0: i32, %arg1: i32, %arg2: memref<8x128xbf16, #tpu.memory_space<vmem>>, %arg3: memref<1x8x128xf32, #tpu.memory_space<vmem>>, %arg4: memref<1x256x128xbf16, #tpu.memory_space<vmem>>, %arg5: memref<1x256x128xbf16, #tpu.memory_space<vmem>>, %arg6: memref<1x128x128xbf16, #tpu.memory_space<vmem>>, %arg7: memref<1x128x128xbf16, #tpu.memory_space<vmem>>, %arg8: memref<1x4x128xf32, #tpu.memory_space<vmem>>, %arg9: memref<1x8x128xf32, #tpu.memory_space<vmem>>, %arg10: memref<8x256xbf16, #tpu.memory_space<vmem>>, %arg11: memref<8x128xbf16, #tpu.memory_space<vmem>>) attributes {dimension_semantics = [#tpu.dimension_semantics<arbitrary>, #tpu.dimension_semantics<arbitrary>], iteration_bounds = array<i64: 2, 1>, scalar_prefetch = 0 : i64, scratch_operands = 2 : i64, tpu.core_type = #tpu.core_type<tc>, window_params = [{pipeline_mode = #tpu.pipeline_mode<synchronous>, transform_indices = @transform_0, window_bounds = array<i64: 8, 128>}, {transform_indices = @transform_1, window_bounds = array<i64: 1, 8, 128>}, {transform_indices = @transform_2, window_bounds = array<i64: 1, 256, 128>}, {transform_indices = @transform_3, window_bounds = array<i64: 1, 256, 128>}, {transform_indices = @transform_4, window_bounds = array<i64: 1, 128, 128>}, {transform_indices = @transform_5, window_bounds = array<i64: 1, 128, 128>}, {transform_indices = @transform_6, window_bounds = array<i64: 1, 4, 128>}, {transform_indices = @transform_7, window_bounds = array<i64: 1, 8, 128>}]} {
    %c128_i32 = arith.constant 128 : i32
    %0 = arith.muli %arg1, %c128_i32 : i32
    %1 = tpu.assume_multiple %0, 128 : i32
    %c0_i32 = arith.constant 0 : i32
    %2 = arith.cmpi eq, %arg1, %c0_i32 : i32
    %c0_i32_0 = arith.constant 0 : i32
    %3 = arith.cmpi eq, %arg0, %c0_i32_0 : i32
    %4 = arith.andi %2, %3 : i1
    %5 = arith.extui %4 : i1 to i32
    %c0_i32_1 = arith.constant 0 : i32
    %6 = arith.cmpi ne, %5, %c0_i32_1 : i32
    scf.if %6 {
      %c0_44 = arith.constant 0 : index
      %c0_45 = arith.constant 0 : index
      %73 = vector.load %arg2[%c0_44, %c0_45] : memref<8x128xbf16, #tpu.memory_space<vmem>>, vector<8x128xbf16>
      %c0_46 = arith.constant 0 : index
      %c0_47 = arith.constant 0 : index
      %74 = vector.load %arg10[%c0_46, %c0_47] : memref<8x256xbf16, #tpu.memory_space<vmem>>, vector<8x128xbf16>
      tpu.vector_store %arg10[%c0_46, %c0_47], %73 {strides = array<i32>} : memref<8x256xbf16, #tpu.memory_space<vmem>>, vector<8x128xbf16>,
    } else {
    }
    %c0_i32_2 = arith.constant 0 : i32
    %7 = arith.cmpi eq, %arg1, %c0_i32_2 : i32
    %c0_i32_3 = arith.constant 0 : i32
    %8 = arith.cmpi sgt, %arg0, %c0_i32_3 : i32
    %9 = arith.andi %7, %8 : i1
    %10 = arith.extui %9 : i1 to i32
    %c0_i32_4 = arith.constant 0 : i32
    %11 = arith.cmpi ne, %10, %c0_i32_4 : i32
    scf.if %11 {
      %c0_44 = arith.constant 0 : index
      %c0_45 = arith.constant 0 : index
      %73 = vector.load %arg11[%c0_44, %c0_45] : memref<8x128xbf16, #tpu.memory_space<vmem>>, vector<8x128xbf16>
      %c0_46 = arith.constant 0 : index
      %c0_47 = arith.constant 0 : index
      %74 = vector.load %arg10[%c0_46, %c0_47] : memref<8x256xbf16, #tpu.memory_space<vmem>>, vector<8x128xbf16>
      tpu.vector_store %arg10[%c0_46, %c0_47], %73 {strides = array<i32>} : memref<8x256xbf16, #tpu.memory_space<vmem>>, vector<8x128xbf16>,
    } else {
    }
    %c0_i32_5 = arith.constant 0 : i32
    %12 = arith.cmpi eq, %arg1, %c0_i32_5 : i32
    %13 = arith.extui %12 : i1 to i32
    %c0_i32_6 = arith.constant 0 : i32
    %14 = arith.cmpi ne, %13, %c0_i32_6 : i32
    scf.if %14 {
      %c0_44 = arith.constant 0 : index
      %c0_45 = arith.constant 0 : index
      %c0_46 = arith.constant 0 : index
      %73 = vector.load %arg3[%c0_44, %c0_45, %c0_46] : memref<1x8x128xf32, #tpu.memory_space<vmem>>, vector<1x8x128xf32>
      %74 = vector.shape_cast %73 : vector<1x8x128xf32> to vector<8x128xf32>
      %75 = arith.truncf %74 : vector<8x128xf32> to vector<8x128xbf16>
      %c0_47 = arith.constant 0 : index
      %c128_48 = arith.constant 128 : index
      %76 = vector.load %arg10[%c0_47, %c128_48] : memref<8x256xbf16, #tpu.memory_space<vmem>>, vector<8x128xbf16>
      tpu.vector_store %arg10[%c0_47, %c128_48], %75 {strides = array<i32>} : memref<8x256xbf16, #tpu.memory_space<vmem>>, vector<8x128xbf16>,
    } else {
    }
    %c0 = arith.constant 0 : index
    %c0_7 = arith.constant 0 : index
    %15 = vector.load %arg10[%c0, %c0_7] : memref<8x256xbf16, #tpu.memory_space<vmem>>, vector<8x256xbf16>
    %c0_8 = arith.constant 0 : index
    %c0_9 = arith.constant 0 : index
    %c0_10 = arith.constant 0 : index
    %16 = vector.load %arg4[%c0_8, %c0_9, %c0_10] : memref<1x256x128xbf16, #tpu.memory_space<vmem>>, vector<1x256x128xbf16>
    %17 = vector.shape_cast %16 : vector<1x256x128xbf16> to vector<256x128xbf16>
    %cst = arith.constant dense<0.000000e+00> : vector<8x128xf32>
    %18 = tpu.matmul %15, %17, %cst {dimension_numbers = #tpu.dot_dimension_numbers<[1], [0], [0], [1], [0, 0, 1, 1], [], []>} : vector<8x256xbf16>, vector<256x128xbf16>, vector<8x128xf32> -> vector<8x128xf32>
    %c0_11 = arith.constant 0 : index
    %c0_12 = arith.constant 0 : index
    %c0_13 = arith.constant 0 : index
    %19 = vector.load %arg8[%c0_11, %c0_12, %c0_13] : memref<1x4x128xf32, #tpu.memory_space<vmem>>, vector<1x1x128xf32>
    %20 = vector.shape_cast %19 : vector<1x1x128xf32> to vector<1x128xf32>
    %21 = vector.broadcast %20 : vector<1x128xf32> to vector<8x128xf32>
    %22 = arith.addf %18, %21 : vector<8x128xf32>
    %c0_14 = arith.constant 0 : index
    %c0_15 = arith.constant 0 : index
    %c0_16 = arith.constant 0 : index
    %23 = vector.load %arg5[%c0_14, %c0_15, %c0_16] : memref<1x256x128xbf16, #tpu.memory_space<vmem>>, vector<1x256x128xbf16>
    %24 = vector.shape_cast %23 : vector<1x256x128xbf16> to vector<256x128xbf16>
    %cst_17 = arith.constant dense<0.000000e+00> : vector<8x128xf32>
    %25 = tpu.matmul %15, %24, %cst_17 {dimension_numbers = #tpu.dot_dimension_numbers<[1], [0], [0], [1], [0, 0, 1, 1], [], []>} : vector<8x256xbf16>, vector<256x128xbf16>, vector<8x128xf32> -> vector<8x128xf32>
    %c0_18 = arith.constant 0 : index
    %c1 = arith.constant 1 : index
    %c0_19 = arith.constant 0 : index
    %26 = vector.load %arg8[%c0_18, %c1, %c0_19] : memref<1x4x128xf32, #tpu.memory_space<vmem>>, vector<1x1x128xf32>
    %27 = vector.shape_cast %26 : vector<1x1x128xf32> to vector<1x128xf32>
    %28 = vector.broadcast %27 : vector<1x128xf32> to vector<8x128xf32>
    %29 = arith.addf %25, %28 : vector<8x128xf32>
    %c0_20 = arith.constant 0 : index
    %c0_21 = arith.constant 0 : index
    %30 = vector.load %arg10[%c0_20, %c0_21] : memref<8x256xbf16, #tpu.memory_space<vmem>>, vector<8x128xbf16>
    %c0_22 = arith.constant 0 : index
    %c0_23 = arith.constant 0 : index
    %c0_24 = arith.constant 0 : index
    %31 = vector.load %arg6[%c0_22, %c0_23, %c0_24] : memref<1x128x128xbf16, #tpu.memory_space<vmem>>, vector<1x128x128xbf16>
    %32 = vector.shape_cast %31 : vector<1x128x128xbf16> to vector<128x128xbf16>
    %cst_25 = arith.constant dense<0.000000e+00> : vector<8x128xf32>
    %33 = tpu.matmul %30, %32, %cst_25 {dimension_numbers = #tpu.dot_dimension_numbers<[1], [0], [0], [1], [0, 0, 1, 1], [], []>} : vector<8x128xbf16>, vector<128x128xbf16>, vector<8x128xf32> -> vector<8x128xf32>
    %c0_26 = arith.constant 0 : index
    %c2 = arith.constant 2 : index
    %c0_27 = arith.constant 0 : index
    %34 = vector.load %arg8[%c0_26, %c2, %c0_27] : memref<1x4x128xf32, #tpu.memory_space<vmem>>, vector<1x1x128xf32>
    %35 = vector.shape_cast %34 : vector<1x1x128xf32> to vector<1x128xf32>
    %36 = vector.broadcast %35 : vector<1x128xf32> to vector<8x128xf32>
    %37 = arith.addf %33, %36 : vector<8x128xf32>
    %c0_28 = arith.constant 0 : index
    %c128 = arith.constant 128 : index
    %38 = vector.load %arg10[%c0_28, %c128] : memref<8x256xbf16, #tpu.memory_space<vmem>>, vector<8x128xbf16>
    %c0_29 = arith.constant 0 : index
    %c0_30 = arith.constant 0 : index
    %c0_31 = arith.constant 0 : index
    %39 = vector.load %arg7[%c0_29, %c0_30, %c0_31] : memref<1x128x128xbf16, #tpu.memory_space<vmem>>, vector<1x128x128xbf16>
    %40 = vector.shape_cast %39 : vector<1x128x128xbf16> to vector<128x128xbf16>
    %cst_32 = arith.constant dense<0.000000e+00> : vector<8x128xf32>
    %41 = tpu.matmul %38, %40, %cst_32 {dimension_numbers = #tpu.dot_dimension_numbers<[1], [0], [0], [1], [0, 0, 1, 1], [], []>} : vector<8x128xbf16>, vector<128x128xbf16>, vector<8x128xf32> -> vector<8x128xf32>
    %c0_33 = arith.constant 0 : index
    %c3 = arith.constant 3 : index
    %c0_34 = arith.constant 0 : index
    %42 = vector.load %arg8[%c0_33, %c3, %c0_34] : memref<1x4x128xf32, #tpu.memory_space<vmem>>, vector<1x1x128xf32>
    %43 = vector.shape_cast %42 : vector<1x1x128xf32> to vector<1x128xf32>
    %44 = vector.broadcast %43 : vector<1x128xf32> to vector<8x128xf32>
    %45 = arith.addf %41, %44 : vector<8x128xf32>
    %46 = arith.negf %22 : vector<8x128xf32>
    %47 = math.exp %46 : vector<8x128xf32>
    %cst_35 = arith.constant 1.000000e+00 : f32
    %48 = vector.broadcast %cst_35 : f32 to vector<8x128xf32>
    %49 = arith.addf %48, %47 : vector<8x128xf32>
    %50 = arith.divf %48, %49 : vector<8x128xf32>
    %51 = arith.negf %29 : vector<8x128xf32>
    %52 = math.exp %51 : vector<8x128xf32>
    %cst_36 = arith.constant 1.000000e+00 : f32
    %53 = vector.broadcast %cst_36 : f32 to vector<8x128xf32>
    %54 = arith.addf %53, %52 : vector<8x128xf32>
    %55 = arith.divf %53, %54 : vector<8x128xf32>
    %56 = arith.mulf %50, %45 : vector<8x128xf32>
    %57 = arith.addf %37, %56 : vector<8x128xf32>
    %58 = math.tanh %57 : vector<8x128xf32>
    %c0_37 = arith.constant 0 : index
    %c0_38 = arith.constant 0 : index
    %59 = arith.index_cast %1 : i32 to index
    %60 = vector.load %arg3[%c0_37, %c0_38, %59] : memref<1x8x128xf32, #tpu.memory_space<vmem>>, vector<1x8x128xf32>
    %61 = vector.shape_cast %60 : vector<1x8x128xf32> to vector<8x128xf32>
    %cst_39 = arith.constant 1.000000e+00 : f32
    %62 = vector.broadcast %cst_39 : f32 to vector<8x128xf32>
    %63 = arith.subf %62, %55 : vector<8x128xf32>
    %64 = arith.mulf %63, %58 : vector<8x128xf32>
    %65 = arith.mulf %55, %61 : vector<8x128xf32>
    %66 = arith.addf %64, %65 : vector<8x128xf32>
    %c0_40 = arith.constant 0 : index
    %c0_41 = arith.constant 0 : index
    %c0_42 = arith.constant 0 : index
    %67 = vector.load %arg9[%c0_40, %c0_41, %c0_42] : memref<1x8x128xf32, #tpu.memory_space<vmem>>, vector<1x8x128xf32>
    %68 = vector.shape_cast %67 : vector<1x8x128xf32> to vector<8x128xf32>
    %69 = vector.shape_cast %66 : vector<8x128xf32> to vector<1x8x128xf32>
    tpu.vector_store %arg9[%c0_40, %c0_41, %c0_42], %69 {strides = array<i32>} : memref<1x8x128xf32, #tpu.memory_space<vmem>>, vector<1x8x128xf32>,
    %70 = arith.truncf %66 : vector<8x128xf32> to vector<8x128xbf16>
    %c0_43 = arith.constant 0 : index
    %71 = arith.index_cast %1 : i32 to index
    %72 = vector.load %arg11[%c0_43, %71] : memref<8x128xbf16, #tpu.memory_space<vmem>>, vector<8x128xbf16>
    tpu.vector_store %arg11[%c0_43, %71], %70 {strides = array<i32>} : memref<8x128xbf16, #tpu.memory_space<vmem>>, vector<8x128xbf16>,
    return
  }
  func.func @transform_0(%arg0: i32, %arg1: i32) -> (i32, i32) {
    %c0_i32 = arith.constant 0 : i32
    %c0_i32_0 = arith.constant 0 : i32
    %c0_i32_1 = arith.constant 0 : i32
    return %c0_i32, %c0_i32_0 : i32, i32
  }
  func.func @transform_1(%arg0: i32, %arg1: i32) -> (i32, i32, i32) {
    %c0_i32 = arith.constant 0 : i32
    %c0_i32_0 = arith.constant 0 : i32
    %c0_i32_1 = arith.constant 0 : i32
    return %arg0, %c0_i32, %c0_i32_0 : i32, i32, i32
  }
  func.func @transform_2(%arg0: i32, %arg1: i32) -> (i32, i32, i32) {
    %c0_i32 = arith.constant 0 : i32
    %c0_i32_0 = arith.constant 0 : i32
    return %arg0, %c0_i32, %arg1 : i32, i32, i32
  }
  func.func @transform_3(%arg0: i32, %arg1: i32) -> (i32, i32, i32) {
    %c0_i32 = arith.constant 0 : i32
    %c0_i32_0 = arith.constant 0 : i32
    return %arg0, %c0_i32, %arg1 : i32, i32, i32
  }
  func.func @transform_4(%arg0: i32, %arg1: i32) -> (i32, i32, i32) {
    %c0_i32 = arith.constant 0 : i32
    %c0_i32_0 = arith.constant 0 : i32
    return %arg0, %c0_i32, %arg1 : i32, i32, i32
  }
  func.func @transform_5(%arg0: i32, %arg1: i32) -> (i32, i32, i32) {
    %c0_i32 = arith.constant 0 : i32
    %c0_i32_0 = arith.constant 0 : i32
    return %arg0, %c0_i32, %arg1 : i32, i32, i32
  }
  func.func @transform_6(%arg0: i32, %arg1: i32) -> (i32, i32, i32) {
    %c0_i32 = arith.constant 0 : i32
    %c0_i32_0 = arith.constant 0 : i32
    return %arg0, %c0_i32, %arg1 : i32, i32, i32
  }
  func.func @transform_7(%arg0: i32, %arg1: i32) -> (i32, i32, i32) {
    %c0_i32 = arith.constant 0 : i32
    %c0_i32_0 = arith.constant 0 : i32
    return %arg0, %c0_i32, %arg1 : i32, i32, i32
  }
}

</mosaic_0001>

<llo_original>
// kernel: tpu_custom_call.1
$region0: #{tpu_custom_call.1}
  #allocation0 [shape = 'u32[]', space=smem, size = 0x4, offset = 0x4, fixed_abs, tag = 'smem constant byte address 0x4 - core index']
  #allocation1 [shape = 'u32[144,128]{1,0:T(1,128)}', space=vmem, size = 0x12000, scoped, tag = 'internal scratch']
  #allocation2 [shape = 'bf16[8,256]{1,0:T(8,128)(2,1)}', space=vmem, size = 0x1000, scoped, tag = 'scratch operand']
  #allocation3 [shape = 'bf16[8,128]{1,0:T(8,128)(2,1)}', space=vmem, size = 0x800, scoped, tag = 'scratch operand']
  %s0 = inlined_call_operand.hbm [shape: bf16[8,128], index: 0, kind: input, shape index: {}]
  %s1 = inlined_call_operand.hbm [shape: f32[2,8,128], index: 1, kind: input, shape index: {}]
  %s2 = inlined_call_operand.hbm [shape: bf16[2,256,128], index: 2, kind: input, shape index: {}]
  %s3 = inlined_call_operand.hbm [shape: bf16[2,256,128], index: 3, kind: input, shape index: {}]
  %s4 = inlined_call_operand.hbm [shape: bf16[2,128,128], index: 4, kind: input, shape index: {}]
  %s5 = inlined_call_operand.hbm [shape: bf16[2,128,128], index: 5, kind: input, shape index: {}]
  %s6 = inlined_call_operand.vmem [shape: f32[2,4,128], index: 6, kind: input, shape index: {}]
  %s7 = inlined_call_operand.hbm [shape: f32[2,8,128], index: 7, kind: output, shape index: {}]
  %s8 = sld [smem:[#allocation0]]
  $region97: #{tpu_custom_call.1} parent=0
    _
  %s10 = ssub.s32 1, %s8
  %s11 = scalar_select 0, %s10, %s8
  $region1: #{tpu_custom_call.1} parent=0
    #allocation4 [shape = 'u8[2048]{0}', space=vmem, size = 0x800, scoped, tag = 'input window, operand 0, single buffered']
    #allocation5 [shape = 's32[2]{0}', space=sflag, size = 0x8, scoped, tag = 'scoped memory for tpu_custom_call.1']
    #allocation6 [shape = 's32[2]{0}', space=sflag, size = 0x8, scoped, tag = 'scoped memory for tpu_custom_call.1']
    #allocation7 [shape = 'u8[8192]{0}', space=vmem, size = 0x2000, scoped, tag = 'input window, operand 1']
    #allocation8 [shape = 's32[2]{0}', space=sflag, size = 0x8, scoped, tag = 'scoped memory for tpu_custom_call.1']
    #allocation9 [shape = 'u8[131072]{0}', space=vmem, size = 0x20000, scoped, tag = 'input window, operand 2']
    #allocation10 [shape = 'u8[131072]{0}', space=vmem, size = 0x20000, scoped, tag = 'input window, operand 3']
    #allocation11 [shape = 's32[2]{0}', space=sflag, size = 0x8, scoped, tag = 'scoped memory for tpu_custom_call.1']
    #allocation12 [shape = 'u8[65536]{0}', space=vmem, size = 0x10000, scoped, tag = 'input window, operand 4']
    #allocation13 [shape = 'u8[65536]{0}', space=vmem, size = 0x10000, scoped, tag = 'input window, operand 5']
    #allocation14 [shape = 's32[2]{0}', space=sflag, size = 0x8, scoped, tag = 'scoped memory for tpu_custom_call.1']
    #allocation15 [shape = 'u8[8192]{0}', space=vmem, size = 0x2000, scoped, tag = 'output window, operand 0']
    %12 = vsyncpa [#allocation5], 0
    %13 = vsyncpa [#allocation8], 0
    %s14 = scalar_lea.sflag [#allocation8], 1
    %15 = vsyncpa %s14, 0
    %16 = vsyncpa [#allocation11], 0
    %s17 = scalar_lea.sflag [#allocation11], 1
    %18 = vsyncpa %s17, 0
    %19 = vsyncpa [#allocation14], 0
    %s20 = scalar_lea.sflag [#allocation14], 1
    %21 = vsyncpa %s20, 0
    %22 = vsyncpa [#allocation6], 0
    %s23 = scalar_lea.sflag [#allocation6], 1
    %24 = vsyncpa %s23, 0
    loop: start=0, step=1, limit=4
    $region2: #{tpu_custom_call.1} parent=1 // loop_pre_header
      _
    $region3: #{tpu_custom_call.1} parent=1 // loop_header
      %s26 = sphi 0, %s30
      %p27 = scmp.ge.s32.totalorder %s26, 4
      %s33 = sphi 0, %s45
      %s34 = sphi 0, %s41
      %s35 = sphi 0, %s33
      %s36 = sphi 0, %s34
      %s37 = sphi 0, %s35
      %s38 = sphi 0, %s36
      %s46 = sphi 0, %s46
      %s48 = sphi 0, %s46
      %s49 = sphi 0, %s48
      %s63 = sphi 0, %s49
      %s69 = sphi 0, %s71
      %s72 = sphi 0, %s69
      %s73 = sphi 0, %s72
      %s89 = sphi 0, %s73
      %s97 = sphi 0, %s99
      %s100 = sphi 0, %s97
      %s101 = sphi 0, %s100
      %s117 = sphi 0, %s101
      %s125 = sphi 0, %s127
      %s128 = sphi 0, %s125
      %s129 = sphi 0, %s128
      %s145 = sphi 0, %s129
      %s153 = sphi 0, %s155
      %s156 = sphi 0, %s153
      %s157 = sphi 0, %s156
      %s173 = sphi 0, %s157
      %s181 = sphi 0, %s183
      %s184 = sphi 0, %s181
      %s185 = sphi 0, %s184
      %s201 = sphi 0, %s185
      %s209 = sphi 0, %s211
      %s212 = sphi 0, %s209
      %s213 = sphi 0, %s212
      %s229 = sphi 0, %s213
      %s237 = sphi 0, %s239
      %s240 = sphi 0, %s237
      %s241 = sphi 0, %s240
      %s257 = sphi 0, %s241
    $region4: #{tpu_custom_call.1} parent=1 // loop_header_branch
      %29 = sbr.rel (%p27) target = $region8
    $region5: #{tpu_custom_call.1} parent=1 // loop_body
      %s31 = ssub.s32 %s26, 1
      %s32 = ssub.s32 %s26, 2
      %s39 = sadd.s32 1, %s34
      %p40 = scmp.ge.s32.totalorder %s39, 1
      %s41 = scalar_select %p40, 0, %s39
      %s42 = sadd.s32 1, %s33
      %s43 = scalar_select %p40, %s42, %s33
      %p44 = scmp.ge.s32.totalorder %s43, 2
      %s45 = scalar_select %p44, 0, %s43
      %s47 = sadd.s32 %s46, 1
      %p50 = scmp.eq.s32.totalorder %s26, 1
      %p51 = scmp.ne.s32.totalorder %s46, %s48
      %p52 = scmp.eq.s32.totalorder %s26, 0
      %p53 = por %p51, %p52
      %p54 = scmp.ne.s32.totalorder %s46, %s48
      %p55 = scmp.eq.s32.totalorder %s31, 1
      %p56 = por %p54, %p55
      %p57 = scmp.ne.s32.totalorder %s48, %s49
      %p58 = scmp.eq.s32.totalorder %s31, 0
      %p59 = por %p57, %p58
      %p60 = scmp.ne.s32.totalorder %s48, %s49
      %p61 = scmp.eq.s32.totalorder %s32, 1
      %p62 = por %p60, %p61
      %p64 = scmp.ne.s32.totalorder %s49, %s63
      %p65 = scmp.eq.s32.totalorder %s32, 0
      %p66 = por %p64, %p65
      %s67 = ssub.s32 %s33, %s45
      %p68 = scmp.eq.s32.totalorder %s67, 0
      %s70 = sadd.s32 %s69, 1
      %s71 = scalar_select %p68, %s69, %s70
      %p74 = pneg %p68
      %p75 = scmp.eq.s32.totalorder %s26, 1
      %p76 = por %p74, %p75
      %p77 = scmp.ne.s32.totalorder %s69, %s72
      %p78 = scmp.eq.s32.totalorder %s26, 0
      %p79 = por %p77, %p78
      %p80 = scmp.ne.s32.totalorder %s69, %s72
      %p81 = scmp.eq.s32.totalorder %s31, 1
      %p82 = por %p80, %p81
      %p83 = scmp.ne.s32.totalorder %s72, %s73
      %p84 = scmp.eq.s32.totalorder %s31, 0
      %p85 = por %p83, %p84
      %p86 = scmp.ne.s32.totalorder %s72, %s73
      %p87 = scmp.eq.s32.totalorder %s32, 1
      %p88 = por %p86, %p87
      %p90 = scmp.ne.s32.totalorder %s73, %s89
      %p91 = scmp.eq.s32.totalorder %s32, 0
      %p92 = por %p90, %p91
      %s93 = ssub.s32 %s33, %s45
      %s94 = ssub.s32 %s34, %s41
      %s95 = sor.u32 %s93, %s94
      %p96 = scmp.eq.s32.totalorder %s95, 0
      %s98 = sadd.s32 %s97, 1
      %s99 = scalar_select %p96, %s97, %s98
      %p102 = pneg %p96
      %p103 = scmp.eq.s32.totalorder %s26, 1
      %p104 = por %p102, %p103
      %p105 = scmp.ne.s32.totalorder %s97, %s100
      %p106 = scmp.eq.s32.totalorder %s26, 0
      %p107 = por %p105, %p106
      %p108 = scmp.ne.s32.totalorder %s97, %s100
      %p109 = scmp.eq.s32.totalorder %s31, 1
      %p110 = por %p108, %p109
      %p111 = scmp.ne.s32.totalorder %s100, %s101
      %p112 = scmp.eq.s32.totalorder %s31, 0
      %p113 = por %p111, %p112
      %p114 = scmp.ne.s32.totalorder %s100, %s101
      %p115 = scmp.eq.s32.totalorder %s32, 1
      %p116 = por %p114, %p115
      %p118 = scmp.ne.s32.totalorder %s101, %s117
      %p119 = scmp.eq.s32.totalorder %s32, 0
      %p120 = por %p118, %p119
      %s121 = ssub.s32 %s33, %s45
      %s122 = ssub.s32 %s34, %s41
      %s123 = sor.u32 %s121, %s122
      %p124 = scmp.eq.s32.totalorder %s123, 0
      %s126 = sadd.s32 %s125, 1
      %s127 = scalar_select %p124, %s125, %s126
      %p130 = pneg %p124
      %p131 = scmp.eq.s32.totalorder %s26, 1
      %p132 = por %p130, %p131
      %p133 = scmp.ne.s32.totalorder %s125, %s128
      %p134 = scmp.eq.s32.totalorder %s26, 0
      %p135 = por %p133, %p134
      %p136 = scmp.ne.s32.totalorder %s125, %s128
      %p137 = scmp.eq.s32.totalorder %s31, 1
      %p138 = por %p136, %p137
      %p139 = scmp.ne.s32.totalorder %s128, %s129
      %p140 = scmp.eq.s32.totalorder %s31, 0
      %p141 = por %p139, %p140
      %p142 = scmp.ne.s32.totalorder %s128, %s129
      %p143 = scmp.eq.s32.totalorder %s32, 1
      %p144 = por %p142, %p143
      %p146 = scmp.ne.s32.totalorder %s129, %s145
      %p147 = scmp.eq.s32.totalorder %s32, 0
      %p148 = por %p146, %p147
      %s149 = ssub.s32 %s33, %s45
      %s150 = ssub.s32 %s34, %s41
      %s151 = sor.u32 %s149, %s150
      %p152 = scmp.eq.s32.totalorder %s151, 0
      %s154 = sadd.s32 %s153, 1
      %s155 = scalar_select %p152, %s153, %s154
      %p158 = pneg %p152
      %p159 = scmp.eq.s32.totalorder %s26, 1
      %p160 = por %p158, %p159
      %p161 = scmp.ne.s32.totalorder %s153, %s156
      %p162 = scmp.eq.s32.totalorder %s26, 0
      %p163 = por %p161, %p162
      %p164 = scmp.ne.s32.totalorder %s153, %s156
      %p165 = scmp.eq.s32.totalorder %s31, 1
      %p166 = por %p164, %p165
      %p167 = scmp.ne.s32.totalorder %s156, %s157
      %p168 = scmp.eq.s32.totalorder %s31, 0
      %p169 = por %p167, %p168
      %p170 = scmp.ne.s32.totalorder %s156, %s157
      %p171 = scmp.eq.s32.totalorder %s32, 1
      %p172 = por %p170, %p171
      %p174 = scmp.ne.s32.totalorder %s157, %s173
      %p175 = scmp.eq.s32.totalorder %s32, 0
      %p176 = por %p174, %p175
      %s177 = ssub.s32 %s33, %s45
      %s178 = ssub.s32 %s34, %s41
      %s179 = sor.u32 %s177, %s178
      %p180 = scmp.eq.s32.totalorder %s179, 0
      %s182 = sadd.s32 %s181, 1
      %s183 = scalar_select %p180, %s181, %s182
      %p186 = pneg %p180
      %p187 = scmp.eq.s32.totalorder %s26, 1
      %p188 = por %p186, %p187
      %p189 = scmp.ne.s32.totalorder %s181, %s184
      %p190 = scmp.eq.s32.totalorder %s26, 0
      %p191 = por %p189, %p190
      %p192 = scmp.ne.s32.totalorder %s181, %s184
      %p193 = scmp.eq.s32.totalorder %s31, 1
      %p194 = por %p192, %p193
      %p195 = scmp.ne.s32.totalorder %s184, %s185
      %p196 = scmp.eq.s32.totalorder %s31, 0
      %p197 = por %p195, %p196
      %p198 = scmp.ne.s32.totalorder %s184, %s185
      %p199 = scmp.eq.s32.totalorder %s32, 1
      %p200 = por %p198, %p199
      %p202 = scmp.ne.s32.totalorder %s185, %s201
      %p203 = scmp.eq.s32.totalorder %s32, 0
      %p204 = por %p202, %p203
      %s205 = ssub.s32 %s33, %s45
      %s206 = ssub.s32 %s34, %s41
      %s207 = sor.u32 %s205, %s206
      %p208 = scmp.eq.s32.totalorder %s207, 0
      %s210 = sadd.s32 %s209, 1
      %s211 = scalar_select %p208, %s209, %s210
      %p214 = pneg %p208
      %p215 = scmp.eq.s32.totalorder %s26, 1
      %p216 = por %p214, %p215
      %p217 = scmp.ne.s32.totalorder %s209, %s212
      %p218 = scmp.eq.s32.totalorder %s26, 0
      %p219 = por %p217, %p218
      %p220 = scmp.ne.s32.totalorder %s209, %s212
      %p221 = scmp.eq.s32.totalorder %s31, 1
      %p222 = por %p220, %p221
      %p223 = scmp.ne.s32.totalorder %s212, %s213
      %p224 = scmp.eq.s32.totalorder %s31, 0
      %p225 = por %p223, %p224
      %p226 = scmp.ne.s32.totalorder %s212, %s213
      %p227 = scmp.eq.s32.totalorder %s32, 1
      %p228 = por %p226, %p227
      %p230 = scmp.ne.s32.totalorder %s213, %s229
      %p231 = scmp.eq.s32.totalorder %s32, 0
      %p232 = por %p230, %p231
      %s233 = ssub.s32 %s33, %s45
      %s234 = ssub.s32 %s34, %s41
      %s235 = sor.u32 %s233, %s234
      %p236 = scmp.eq.s32.totalorder %s235, 0
      %s238 = sadd.s32 %s237, 1
      %s239 = scalar_select %p236, %s237, %s238
      %p242 = pneg %p236
      %p243 = scmp.eq.s32.totalorder %s26, 1
      %p244 = por %p242, %p243
      %p245 = scmp.ne.s32.totalorder %s237, %s240
      %p246 = scmp.eq.s32.totalorder %s26, 0
      %p247 = por %p245, %p246
      %p248 = scmp.ne.s32.totalorder %s237, %s240
      %p249 = scmp.eq.s32.totalorder %s31, 1
      %p250 = por %p248, %p249
      %p251 = scmp.ne.s32.totalorder %s240, %s241
      %p252 = scmp.eq.s32.totalorder %s31, 0
      %p253 = por %p251, %p252
      %p254 = scmp.ne.s32.totalorder %s240, %s241
      %p255 = scmp.eq.s32.totalorder %s32, 1
      %p256 = por %p254, %p255
      %p258 = scmp.ne.s32.totalorder %s241, %s257
      %p259 = scmp.eq.s32.totalorder %s32, 0
      %p260 = por %p258, %p259
      %p261 = scmp.le.s32.totalorder 1, %s26
      %p262 = scmp.lt.s32.totalorder %s26, 3
      %p263 = pnand %p261, %p262
      %p264 = pneg %p263
      // Predicated region
      $region9: #{tpu_custom_call.1} parent=5 // pred_check
        _
      $region10: #{tpu_custom_call.1} parent=5 // pred_check_branch
        %266 = sbr.rel (%p263) target = $region12
      $region11: #{tpu_custom_call.1} parent=5 // pred_region
        %s267 = ssub.s32 %s26, 1
        // Predicated region
        $region13: #{tpu_custom_call.1} parent=11 // pred_check
          %p268 = pneg %p59
        $region14: #{tpu_custom_call.1} parent=11 // pred_check_branch
          %270 = sbr.rel (%p268) target = $region16
        $region15: #{tpu_custom_call.1} parent=11 // pred_region
          %s272 = ssub.s32 64, 64
          %273 = vsyncadd [#allocation5], %s272
          %s275 = sshll.u32 [#allocation4], 4
          %s276 = int_to_ptr.vmem [resolvable:$true] %s275
          %278 = dma.hbm_to_vmem [thread:$0]  %s0, 64, %s276, [#allocation5]
        $region16: #{tpu_custom_call.1} parent=11 // pred_fallthru
          _
      $region12: #{tpu_custom_call.1} parent=5 // pred_fallthru
        _
      %p279 = scmp.lt.s32.totalorder %s26, 2
      // Predicated region
      $region17: #{tpu_custom_call.1} parent=5 // pred_check
        %p280 = pneg %p279
      $region18: #{tpu_custom_call.1} parent=5 // pred_check_branch
        %282 = sbr.rel (%p280) target = $region20
      $region19: #{tpu_custom_call.1} parent=5 // pred_region
        // Predicated region
        $region21: #{tpu_custom_call.1} parent=19 // pred_check
          %p283 = pneg %p79
        $region22: #{tpu_custom_call.1} parent=19 // pred_check_branch
          %285 = sbr.rel (%p283) target = $region24
        $region23: #{tpu_custom_call.1} parent=19 // pred_region
          %s286 = sand.u32 %s26, 1
          %s287 = scalar_lea.sflag [#allocation8], %s286
          %s288 = sand.u32 %s69, 1
          %s289 = smul.addr %s288, 8
          %s290 = scalar_lea.vmem [#allocation7], %s289
          %s292 = ssub.s32 128, 128
          %293 = vsyncadd %s287, %s292
          %s294 = smul.addr %s33, 128
          %s295 = scalar_lea.hbm %s1, %s294
          %s297 = sshll.u32 %s290, 4
          %s298 = int_to_ptr.vmem [resolvable:$true] %s297
          %300 = dma.hbm_to_vmem [thread:$0]  %s295, 128, %s298, %s287
        $region24: #{tpu_custom_call.1} parent=19 // pred_fallthru
          _
        // Predicated region
        $region25: #{tpu_custom_call.1} parent=19 // pred_check
          %p301 = pneg %p107
        $region26: #{tpu_custom_call.1} parent=19 // pred_check_branch
          %303 = sbr.rel (%p301) target = $region28
        $region27: #{tpu_custom_call.1} parent=19 // pred_region
          %s304 = sand.u32 %s26, 1
          %s305 = scalar_lea.sflag [#allocation8], %s304
          %s306 = sand.u32 %s97, 1
          %s307 = smul.addr %s306, 128
          %s308 = scalar_lea.vmem [#allocation9], %s307
          %s310 = ssub.s32 2048, 2048
          %311 = vsyncadd %s305, %s310
          %s312 = smul.addr %s33, 32
          %s313 = sadd.s32 %s34, %s312
          %s314 = smul.addr %s313, 64
          %s315 = scalar_lea.hbm %s2, %s314
          %s316 = sshll.u32 %s308, 4
          %s317 = int_to_ptr.vmem [resolvable:$true] %s316
          %322 = dma.hbm_to_vmem [thread:$0]  %s315, 2048, %s317, %s305, 64, 64, 4
        $region28: #{tpu_custom_call.1} parent=19 // pred_fallthru
          _
        // Predicated region
        $region29: #{tpu_custom_call.1} parent=19 // pred_check
          %p323 = pneg %p135
        $region30: #{tpu_custom_call.1} parent=19 // pred_check_branch
          %325 = sbr.rel (%p323) target = $region32
        $region31: #{tpu_custom_call.1} parent=19 // pred_region
          %s326 = sand.u32 %s26, 1
          %s327 = scalar_lea.sflag [#allocation11], %s326
          %s328 = sand.u32 %s125, 1
          %s329 = smul.addr %s328, 128
          %s330 = scalar_lea.vmem [#allocation10], %s329
          %s332 = ssub.s32 2048, 2048
          %333 = vsyncadd %s327, %s332
          %s334 = smul.addr %s33, 32
          %s335 = sadd.s32 %s34, %s334
          %s336 = smul.addr %s335, 64
          %s337 = scalar_lea.hbm %s3, %s336
          %s338 = sshll.u32 %s330, 4
          %s339 = int_to_ptr.vmem [resolvable:$true] %s338
          %344 = dma.hbm_to_vmem [thread:$0]  %s337, 2048, %s339, %s327, 64, 64, 4
        $region32: #{tpu_custom_call.1} parent=19 // pred_fallthru
          _
        // Predicated region
        $region33: #{tpu_custom_call.1} parent=19 // pred_check
          %p345 = pneg %p163
        $region34: #{tpu_custom_call.1} parent=19 // pred_check_branch
          %347 = sbr.rel (%p345) target = $region36
        $region35: #{tpu_custom_call.1} parent=19 // pred_region
          %s348 = sand.u32 %s26, 1
          %s349 = scalar_lea.sflag [#allocation11], %s348
          %s350 = sand.u32 %s153, 1
          %s351 = smul.addr %s350, 64
          %s352 = scalar_lea.vmem [#allocation12], %s351
          %s354 = ssub.s32 1024, 1024
          %355 = vsyncadd %s349, %s354
          %s356 = smul.addr %s33, 16
          %s357 = sadd.s32 %s34, %s356
          %s358 = smul.addr %s357, 64
          %s359 = scalar_lea.hbm %s4, %s358
          %s360 = sshll.u32 %s352, 4
          %s361 = int_to_ptr.vmem [resolvable:$true] %s360
          %366 = dma.hbm_to_vmem [thread:$0]  %s359, 1024, %s361, %s349, 64, 64, 4
        $region36: #{tpu_custom_call.1} parent=19 // pred_fallthru
          _
        // Predicated region
        $region37: #{tpu_custom_call.1} parent=19 // pred_check
          %p367 = pneg %p191
        $region38: #{tpu_custom_call.1} parent=19 // pred_check_branch
          %369 = sbr.rel (%p367) target = $region40
        $region39: #{tpu_custom_call.1} parent=19 // pred_region
          %s370 = sand.u32 %s181, 1
          %s371 = scalar_lea.sflag [#allocation14], %s370
          %s372 = sand.u32 %s181, 1
          %s373 = smul.addr %s372, 64
          %s374 = scalar_lea.vmem [#allocation13], %s373
          %s376 = ssub.s32 1024, 1024
          %377 = vsyncadd %s371, %s376
          %s378 = smul.addr %s33, 16
          %s379 = sadd.s32 %s34, %s378
          %s380 = smul.addr %s379, 64
          %s381 = scalar_lea.hbm %s5, %s380
          %s382 = sshll.u32 %s374, 4
          %s383 = int_to_ptr.vmem [resolvable:$true] %s382
          %388 = dma.hbm_to_vmem [thread:$0]  %s381, 1024, %s383, %s371, 64, 64, 4
        $region40: #{tpu_custom_call.1} parent=19 // pred_fallthru
          _
        // Predicated region
        $region41: #{tpu_custom_call.1} parent=19 // pred_check
          %p389 = pneg %p219
        $region42: #{tpu_custom_call.1} parent=19 // pred_check_branch
          %391 = sbr.rel (%p389) target = $region44
        $region43: #{tpu_custom_call.1} parent=19 // pred_region
          %p392 = scmp.lt.s32.totalorder %s33, 1
          %s393 = scalar_select %p392, %s33, 1
          %p394 = scmp.lt.s32.totalorder %s34, 0
          %s395 = scalar_select %p394, %s34, 0
          %s396 = sadd.s32 %s395, %s393
          %s397 = smul.addr %s396, 4
          %s398 = scalar_lea.vmem %s6, %s397
        $region44: #{tpu_custom_call.1} parent=19 // pred_fallthru
          _
      $region20: #{tpu_custom_call.1} parent=5 // pred_fallthru
        _
      %p399 = scmp.le.s32.totalorder 1, %s26
      %p400 = scmp.lt.s32.totalorder %s26, 3
      %p401 = pnand %p399, %p400
      %p402 = pneg %p401
      // Predicated region
      $region45: #{tpu_custom_call.1} parent=5 // pred_check
        _
      $region46: #{tpu_custom_call.1} parent=5 // pred_check_branch
        %404 = sbr.rel (%p401) target = $region48
      $region47: #{tpu_custom_call.1} parent=5 // pred_region
        %s405 = ssub.s32 %s26, 1
        // Predicated region
        $region49: #{tpu_custom_call.1} parent=47 // pred_check
          %p406 = pneg %p59
        $region50: #{tpu_custom_call.1} parent=47 // pred_check_branch
          %408 = sbr.rel (%p406) target = $region52
        $region51: #{tpu_custom_call.1} parent=47 // pred_region
          %409 = dma.done [#allocation5], 64
        $region52: #{tpu_custom_call.1} parent=47 // pred_fallthru
          _
        %s410 = sand.u32 %s31, 1
        %s411 = scalar_lea.sflag [#allocation8], %s410
        %s412 = sand.u32 %s72, 1
        %s413 = smul.addr %s412, 8
        %s414 = scalar_lea.vmem [#allocation7], %s413
        // Predicated region
        $region53: #{tpu_custom_call.1} parent=47 // pred_check
          %p415 = pneg %p85
        $region54: #{tpu_custom_call.1} parent=47 // pred_check_branch
          %417 = sbr.rel (%p415) target = $region56
        $region55: #{tpu_custom_call.1} parent=47 // pred_region
          %418 = dma.done %s411, 128
        $region56: #{tpu_custom_call.1} parent=47 // pred_fallthru
          _
        %s419 = sand.u32 %s31, 1
        %s420 = scalar_lea.sflag [#allocation8], %s419
        %s421 = sand.u32 %s100, 1
        %s422 = smul.addr %s421, 128
        %s423 = scalar_lea.vmem [#allocation9], %s422
        // Predicated region
        $region57: #{tpu_custom_call.1} parent=47 // pred_check
          %p424 = pneg %p113
        $region58: #{tpu_custom_call.1} parent=47 // pred_check_branch
          %426 = sbr.rel (%p424) target = $region60
        $region59: #{tpu_custom_call.1} parent=47 // pred_region
          %427 = dma.done %s420, 2048
        $region60: #{tpu_custom_call.1} parent=47 // pred_fallthru
          _
        %s428 = sand.u32 %s31, 1
        %s429 = scalar_lea.sflag [#allocation11], %s428
        %s430 = sand.u32 %s128, 1
        %s431 = smul.addr %s430, 128
        %s432 = scalar_lea.vmem [#allocation10], %s431
        // Predicated region
        $region61: #{tpu_custom_call.1} parent=47 // pred_check
          %p433 = pneg %p141
        $region62: #{tpu_custom_call.1} parent=47 // pred_check_branch
          %435 = sbr.rel (%p433) target = $region64
        $region63: #{tpu_custom_call.1} parent=47 // pred_region
          %436 = dma.done %s429, 2048
        $region64: #{tpu_custom_call.1} parent=47 // pred_fallthru
          _
        %s437 = sand.u32 %s31, 1
        %s438 = scalar_lea.sflag [#allocation11], %s437
        %s439 = sand.u32 %s156, 1
        %s440 = smul.addr %s439, 64
        %s441 = scalar_lea.vmem [#allocation12], %s440
        // Predicated region
        $region65: #{tpu_custom_call.1} parent=47 // pred_check
          %p442 = pneg %p169
        $region66: #{tpu_custom_call.1} parent=47 // pred_check_branch
          %444 = sbr.rel (%p442) target = $region68
        $region67: #{tpu_custom_call.1} parent=47 // pred_region
          %445 = dma.done %s438, 1024
        $region68: #{tpu_custom_call.1} parent=47 // pred_fallthru
          _
        %s446 = sand.u32 %s184, 1
        %s447 = scalar_lea.sflag [#allocation14], %s446
        %s448 = sand.u32 %s184, 1
        %s449 = smul.addr %s448, 64
        %s450 = scalar_lea.vmem [#allocation13], %s449
        // Predicated region
        $region69: #{tpu_custom_call.1} parent=47 // pred_check
          %p451 = pneg %p197
        $region70: #{tpu_custom_call.1} parent=47 // pred_check_branch
          %453 = sbr.rel (%p451) target = $region72
        $region71: #{tpu_custom_call.1} parent=47 // pred_region
          %454 = dma.done %s447, 1024
        $region72: #{tpu_custom_call.1} parent=47 // pred_fallthru
          _
        %p455 = pneg %p59
        %p456 = pneg %p56
        %s457 = sand.u32 %s31, 1
        %s458 = scalar_lea.sflag [#allocation8], %s457
        %s459 = sand.u32 %s72, 1
        %s460 = smul.addr %s459, 8
        %s461 = scalar_lea.vmem [#allocation7], %s460
        %p462 = pneg %p85
        %p463 = pneg %p82
        %s464 = sand.u32 %s31, 1
        %s465 = scalar_lea.sflag [#allocation8], %s464
        %s466 = sand.u32 %s100, 1
        %s467 = smul.addr %s466, 128
        %s468 = scalar_lea.vmem [#allocation9], %s467
        %p469 = pneg %p113
        %p470 = pneg %p110
        %s471 = sand.u32 %s31, 1
        %s472 = scalar_lea.sflag [#allocation11], %s471
        %s473 = sand.u32 %s128, 1
        %s474 = smul.addr %s473, 128
        %s475 = scalar_lea.vmem [#allocation10], %s474
        %p476 = pneg %p141
        %p477 = pneg %p138
        %s478 = sand.u32 %s31, 1
        %s479 = scalar_lea.sflag [#allocation11], %s478
        %s480 = sand.u32 %s156, 1
        %s481 = smul.addr %s480, 64
        %s482 = scalar_lea.vmem [#allocation12], %s481
        %p483 = pneg %p169
        %p484 = pneg %p166
        %s485 = sand.u32 %s184, 1
        %s486 = scalar_lea.sflag [#allocation14], %s485
        %s487 = sand.u32 %s184, 1
        %s488 = smul.addr %s487, 64
        %s489 = scalar_lea.vmem [#allocation13], %s488
        %p490 = pneg %p197
        %p491 = pneg %p194
        %p492 = scmp.lt.s32.totalorder %s35, 1
        %s493 = scalar_select %p492, %s35, 1
        %p494 = scmp.lt.s32.totalorder %s36, 0
        %s495 = scalar_select %p494, %s36, 0
        %s496 = sadd.s32 %s495, %s493
        %s497 = smul.addr %s496, 4
        %s498 = scalar_lea.vmem %s6, %s497
        %p499 = pneg %p225
        %p500 = pneg %p222
        %p501 = pneg %p253
        %p502 = pneg %p250
        %s503 = sand.u32 %s240, 1
        %s504 = scalar_lea.sflag [#allocation6], %s503
        %s505 = sand.u32 %s240, 1
        %s506 = smul.addr %s505, 8
        %s507 = scalar_lea.vmem [#allocation15], %s506
        %p508 = scmp.lt.s32.totalorder %s35, 1
        %s509 = scalar_select %p508, %s35, 1
        %p510 = scmp.lt.s32.totalorder %s36, 0
        %s511 = scalar_select %p510, %s36, 0
        %s512 = sadd.s32 %s511, %s509
        %s513 = smul.addr %s512, 4
        %s514 = scalar_lea.vmem %s6, %s513
        %s516 = smul.u32 %s36, 128
        %p517 = scmp.eq.s32.totalorder %s36, 0
        %p518 = scmp.eq.s32.totalorder %s35, 0
        %p519 = pnand %p517, %p518
        %p520 = pneg %p519
        // Predicated region
        $region73: #{tpu_custom_call.1} parent=47 // pred_check
          _
        $region74: #{tpu_custom_call.1} parent=47 // pred_check_branch
          %522 = sbr.rel (%p519) target = $region76
        $region75: #{tpu_custom_call.1} parent=47 // pred_region
          %v523 = vld [vmem:[#allocation4] sm:$0xf]
          %524 = vst [vmem:[#allocation2] sm:$0xf] %v523
        $region76: #{tpu_custom_call.1} parent=47 // pred_fallthru
          _
        %p525 = scmp.gt.s32.totalorder %s35, 0
        %p526 = pnand %p517, %p525
        %p527 = pneg %p526
        // Predicated region
        $region77: #{tpu_custom_call.1} parent=47 // pred_check
          _
        $region78: #{tpu_custom_call.1} parent=47 // pred_check_branch
          %529 = sbr.rel (%p526) target = $region80
        $region79: #{tpu_custom_call.1} parent=47 // pred_region
          %v530 = vld [vmem:[#allocation3] sm:$0xf]
          %531 = vst [vmem:[#allocation2] sm:$0xf] %v530
        $region80: #{tpu_custom_call.1} parent=47 // pred_fallthru
          _
        // Predicated region
        $region81: #{tpu_custom_call.1} parent=47 // pred_check
          %p532 = pneg %p517
        $region82: #{tpu_custom_call.1} parent=47 // pred_check_branch
          %534 = sbr.rel (%p532) target = $region84
        $region83: #{tpu_custom_call.1} parent=47 // pred_region
          %v535 = vld [vmem:[%s414] sm:$0xff]
          %v536 = vpack.c.bf16 %v535, %v535
          %537 = vst [vmem:[#allocation2 + $0x4] sm:$0xf] %v536
        $region84: #{tpu_custom_call.1} parent=47 // pred_fallthru
          _
        %v538 = vld [vmem:[#allocation2] sm:$0xff]
        %v539 = vld [vmem:[%s423] sm:$0xf]
        %v540 = vld [vmem:[%s423 + $0x4] sm:$0xf]
        %v541 = vld [vmem:[%s423 + $0x8] sm:$0xf]
        %v542 = vld [vmem:[%s423 + $0xc] sm:$0xf]
        %v543 = vld [vmem:[%s423 + $0x10] sm:$0xf]
        %v544 = vld [vmem:[%s423 + $0x14] sm:$0xf]
        %v545 = vld [vmem:[%s423 + $0x18] sm:$0xf]
        %v546 = vld [vmem:[%s423 + $0x1c] sm:$0xf]
        %v547 = vld [vmem:[%s423 + $0x20] sm:$0xf]
        %v548 = vld [vmem:[%s423 + $0x24] sm:$0xf]
        %v549 = vld [vmem:[%s423 + $0x28] sm:$0xf]
        %v550 = vld [vmem:[%s423 + $0x2c] sm:$0xf]
        %v551 = vld [vmem:[%s423 + $0x30] sm:$0xf]
        %v552 = vld [vmem:[%s423 + $0x34] sm:$0xf]
        %v553 = vld [vmem:[%s423 + $0x38] sm:$0xf]
        %v554 = vld [vmem:[%s423 + $0x3c] sm:$0xf]
        %v555 = vld [vmem:[%s423 + $0x40] sm:$0xf]
        %v556 = vld [vmem:[%s423 + $0x44] sm:$0xf]
        %v557 = vld [vmem:[%s423 + $0x48] sm:$0xf]
        %v558 = vld [vmem:[%s423 + $0x4c] sm:$0xf]
        %v559 = vld [vmem:[%s423 + $0x50] sm:$0xf]
        %v560 = vld [vmem:[%s423 + $0x54] sm:$0xf]
        %v561 = vld [vmem:[%s423 + $0x58] sm:$0xf]
        %v562 = vld [vmem:[%s423 + $0x5c] sm:$0xf]
        %v563 = vld [vmem:[%s423 + $0x60] sm:$0xf]
        %v564 = vld [vmem:[%s423 + $0x64] sm:$0xf]
        %v565 = vld [vmem:[%s423 + $0x68] sm:$0xf]
        %v566 = vld [vmem:[%s423 + $0x6c] sm:$0xf]
        %v567 = vld [vmem:[%s423 + $0x70] sm:$0xf]
        %v568 = vld [vmem:[%s423 + $0x74] sm:$0xf]
        %v569 = vld [vmem:[%s423 + $0x78] sm:$0xf]
        %v570 = vld [vmem:[%s423 + $0x7c] sm:$0xf]
        %v571 = vld [vmem:[%s514] sm:$0x1]
        %v572 = vlaneseq
        %v573 = vshrl.u32 %v572, 7
        %v574 = vsub.s32 0, %v573
        %v575 = vrot.slane %v571, %v574
        %v577 = vunpack.c.l.b16 %v538
        %v578 = vunpack.c.h.b16 %v538
        %v579 = vpack.c.b16 %v577, %v577
        %v580 = vpack.c.b16 %v578, %v578
        %v615 = vunpack.c.l.b16 %v539
        %v616 = vunpack.c.l.b16 %v540
        %v617 = vunpack.c.l.b16 %v541
        %v618 = vunpack.c.l.b16 %v542
        %v619 = vunpack.c.l.b16 %v543
        %v620 = vunpack.c.l.b16 %v544
        %v621 = vunpack.c.l.b16 %v545
        %v622 = vunpack.c.l.b16 %v546
        %v623 = vunpack.c.l.b16 %v547
        %v624 = vunpack.c.l.b16 %v548
        %v625 = vunpack.c.l.b16 %v549
        %v626 = vunpack.c.l.b16 %v550
        %v627 = vunpack.c.l.b16 %v551
        %v628 = vunpack.c.l.b16 %v552
        %v629 = vunpack.c.l.b16 %v553
        %v630 = vunpack.c.l.b16 %v554
        %v631 = vunpack.c.l.b16 %v555
        %v632 = vunpack.c.l.b16 %v556
        %v633 = vunpack.c.l.b16 %v557
        %v634 = vunpack.c.l.b16 %v558
        %v635 = vunpack.c.l.b16 %v559
        %v636 = vunpack.c.l.b16 %v560
        %v637 = vunpack.c.l.b16 %v561
        %v638 = vunpack.c.l.b16 %v562
        %v639 = vunpack.c.l.b16 %v563
        %v640 = vunpack.c.l.b16 %v564
        %v641 = vunpack.c.l.b16 %v565
        %v642 = vunpack.c.l.b16 %v566
        %v643 = vunpack.c.l.b16 %v567
        %v644 = vunpack.c.l.b16 %v568
        %v645 = vunpack.c.l.b16 %v569
        %v646 = vunpack.c.l.b16 %v570
        %v647 = vpack.c.b16 %v616, %v615
        %v648 = vpack.c.b16 %v618, %v617
        %v649 = vpack.c.b16 %v620, %v619
        %v650 = vpack.c.b16 %v622, %v621
        %v651 = vpack.c.b16 %v624, %v623
        %v652 = vpack.c.b16 %v626, %v625
        %v653 = vpack.c.b16 %v628, %v627
        %v654 = vpack.c.b16 %v630, %v629
        %v655 = vpack.c.b16 %v632, %v631
        %v656 = vpack.c.b16 %v634, %v633
        %v657 = vpack.c.b16 %v636, %v635
        %v658 = vpack.c.b16 %v638, %v637
        %v659 = vpack.c.b16 %v640, %v639
        %v660 = vpack.c.b16 %v642, %v641
        %v661 = vpack.c.b16 %v644, %v643
        %v662 = vpack.c.b16 %v646, %v645
        %679 = vmatprep.subr.bf16.mxu0 0
        %680 = vmatpush1.bf16.msra.mxu0 %v647
        %681 = vmatprep.subr.bf16.mxu0 0
        %682 = vmatpush1.bf16.msra.mxu0 %v648
        %683 = vmatprep.subr.bf16.mxu0 0
        %684 = vmatpush1.bf16.msra.mxu0 %v649
        %685 = vmatprep.subr.bf16.mxu0 0
        %686 = vmatpush1.bf16.msra.mxu0 %v650
        %687 = vmatprep.subr.bf16.mxu0 0
        %688 = vmatpush1.bf16.msra.mxu0 %v651
        %689 = vmatprep.subr.bf16.mxu0 0
        %690 = vmatpush1.bf16.msra.mxu0 %v652
        %691 = vmatprep.subr.bf16.mxu0 0
        %692 = vmatpush1.bf16.msra.mxu0 %v653
        %693 = vmatprep.subr.bf16.mxu0 0
        %694 = vmatpush1.bf16.msra.mxu0 %v654
        %695 = vmatprep.subr.bf16.mxu0 0
        %696 = vmatpush1.bf16.msra.mxu0 %v655
        %697 = vmatprep.subr.bf16.mxu0 0
        %698 = vmatpush1.bf16.msra.mxu0 %v656
        %699 = vmatprep.subr.bf16.mxu0 0
        %700 = vmatpush1.bf16.msra.mxu0 %v657
        %701 = vmatprep.subr.bf16.mxu0 0
        %702 = vmatpush1.bf16.msra.mxu0 %v658
        %703 = vmatprep.subr.bf16.mxu0 0
        %704 = vmatpush1.bf16.msra.mxu0 %v659
        %705 = vmatprep.subr.bf16.mxu0 0
        %706 = vmatpush1.bf16.msra.mxu0 %v660
        %707 = vmatprep.subr.bf16.mxu0 0
        %708 = vmatpush1.bf16.msra.mxu0 %v661
        %709 = vmatprep.subr.bf16.mxu0 0
        %710 = vmatpush1.bf16.msra.mxu0 %v662
        %711 = vmatprep.mubr.bf16.mxu0 %v580
        %712 = vmatmul.mubr.bf16.gmra.mrb[0].mxu0 %v579
        %v713 = vpop.f32.mrb[0].mxu0
        %v714 = vadd.f32 %v575, %v713
        %v715 = vpop.f32.mrb[0].mxu0
        %v716 = vpop.f32.mrb[0].mxu0
        %v717 = vpop.f32.mrb[0].mxu0
        %718 = vdwg.mxu0
        %v719 = vld [vmem:[%s432] sm:$0xf]
        %v720 = vld [vmem:[%s432 + $0x4] sm:$0xf]
        %v721 = vld [vmem:[%s432 + $0x8] sm:$0xf]
        %v722 = vld [vmem:[%s432 + $0xc] sm:$0xf]
        %v723 = vld [vmem:[%s432 + $0x10] sm:$0xf]
        %v724 = vld [vmem:[%s432 + $0x14] sm:$0xf]
        %v725 = vld [vmem:[%s432 + $0x18] sm:$0xf]
        %v726 = vld [vmem:[%s432 + $0x1c] sm:$0xf]
        %v727 = vld [vmem:[%s432 + $0x20] sm:$0xf]
        %v728 = vld [vmem:[%s432 + $0x24] sm:$0xf]
        %v729 = vld [vmem:[%s432 + $0x28] sm:$0xf]
        %v730 = vld [vmem:[%s432 + $0x2c] sm:$0xf]
        %v731 = vld [vmem:[%s432 + $0x30] sm:$0xf]
        %v732 = vld [vmem:[%s432 + $0x34] sm:$0xf]
        %v733 = vld [vmem:[%s432 + $0x38] sm:$0xf]
        %v734 = vld [vmem:[%s432 + $0x3c] sm:$0xf]
        %v735 = vld [vmem:[%s432 + $0x40] sm:$0xf]
        %v736 = vld [vmem:[%s432 + $0x44] sm:$0xf]
        %v737 = vld [vmem:[%s432 + $0x48] sm:$0xf]
        %v738 = vld [vmem:[%s432 + $0x4c] sm:$0xf]
        %v739 = vld [vmem:[%s432 + $0x50] sm:$0xf]
        %v740 = vld [vmem:[%s432 + $0x54] sm:$0xf]
        %v741 = vld [vmem:[%s432 + $0x58] sm:$0xf]
        %v742 = vld [vmem:[%s432 + $0x5c] sm:$0xf]
        %v743 = vld [vmem:[%s432 + $0x60] sm:$0xf]
        %v744 = vld [vmem:[%s432 + $0x64] sm:$0xf]
        %v745 = vld [vmem:[%s432 + $0x68] sm:$0xf]
        %v746 = vld [vmem:[%s432 + $0x6c] sm:$0xf]
        %v747 = vld [vmem:[%s432 + $0x70] sm:$0xf]
        %v748 = vld [vmem:[%s432 + $0x74] sm:$0xf]
        %v749 = vld [vmem:[%s432 + $0x78] sm:$0xf]
        %v750 = vld [vmem:[%s432 + $0x7c] sm:$0xf]
        %v751 = vld [vmem:[%s514 + $0x1] sm:$0x1]
        %v752 = vlaneseq
        %v753 = vshrl.u32 %v752, 7
        %v754 = vsub.s32 0, %v753
        %v755 = vrot.slane %v751, %v754
        %v788 = vunpack.c.l.b16 %v719
        %v789 = vunpack.c.l.b16 %v720
        %v790 = vunpack.c.l.b16 %v721
        %v791 = vunpack.c.l.b16 %v722
        %v792 = vunpack.c.l.b16 %v723
        %v793 = vunpack.c.l.b16 %v724
        %v794 = vunpack.c.l.b16 %v725
        %v795 = vunpack.c.l.b16 %v726
        %v796 = vunpack.c.l.b16 %v727
        %v797 = vunpack.c.l.b16 %v728
        %v798 = vunpack.c.l.b16 %v729
        %v799 = vunpack.c.l.b16 %v730
        %v800 = vunpack.c.l.b16 %v731
        %v801 = vunpack.c.l.b16 %v732
        %v802 = vunpack.c.l.b16 %v733
        %v803 = vunpack.c.l.b16 %v734
        %v804 = vunpack.c.l.b16 %v735
        %v805 = vunpack.c.l.b16 %v736
        %v806 = vunpack.c.l.b16 %v737
        %v807 = vunpack.c.l.b16 %v738
        %v808 = vunpack.c.l.b16 %v739
        %v809 = vunpack.c.l.b16 %v740
        %v810 = vunpack.c.l.b16 %v741
        %v811 = vunpack.c.l.b16 %v742
        %v812 = vunpack.c.l.b16 %v743
        %v813 = vunpack.c.l.b16 %v744
        %v814 = vunpack.c.l.b16 %v745
        %v815 = vunpack.c.l.b16 %v746
        %v816 = vunpack.c.l.b16 %v747
        %v817 = vunpack.c.l.b16 %v748
        %v818 = vunpack.c.l.b16 %v749
        %v819 = vunpack.c.l.b16 %v750
        %v820 = vpack.c.b16 %v789, %v788
        %v821 = vpack.c.b16 %v791, %v790
        %v822 = vpack.c.b16 %v793, %v792
        %v823 = vpack.c.b16 %v795, %v794
        %v824 = vpack.c.b16 %v797, %v796
        %v825 = vpack.c.b16 %v799, %v798
        %v826 = vpack.c.b16 %v801, %v800
        %v827 = vpack.c.b16 %v803, %v802
        %v828 = vpack.c.b16 %v805, %v804
        %v829 = vpack.c.b16 %v807, %v806
        %v830 = vpack.c.b16 %v809, %v808
        %v831 = vpack.c.b16 %v811, %v810
        %v832 = vpack.c.b16 %v813, %v812
        %v833 = vpack.c.b16 %v815, %v814
        %v834 = vpack.c.b16 %v817, %v816
        %v835 = vpack.c.b16 %v819, %v818
        %852 = vmatprep.subr.bf16.mxu0 0
        %853 = vmatpush1.bf16.msra.mxu0 %v820
        %854 = vmatprep.subr.bf16.mxu0 0
        %855 = vmatpush1.bf16.msra.mxu0 %v821
        %856 = vmatprep.subr.bf16.mxu0 0
        %857 = vmatpush1.bf16.msra.mxu0 %v822
        %858 = vmatprep.subr.bf16.mxu0 0
        %859 = vmatpush1.bf16.msra.mxu0 %v823
        %860 = vmatprep.subr.bf16.mxu0 0
        %861 = vmatpush1.bf16.msra.mxu0 %v824
        %862 = vmatprep.subr.bf16.mxu0 0
        %863 = vmatpush1.bf16.msra.mxu0 %v825
        %864 = vmatprep.subr.bf16.mxu0 0
        %865 = vmatpush1.bf16.msra.mxu0 %v826
        %866 = vmatprep.subr.bf16.mxu0 0
        %867 = vmatpush1.bf16.msra.mxu0 %v827
        %868 = vmatprep.subr.bf16.mxu0 0
        %869 = vmatpush1.bf16.msra.mxu0 %v828
        %870 = vmatprep.subr.bf16.mxu0 0
        %871 = vmatpush1.bf16.msra.mxu0 %v829
        %872 = vmatprep.subr.bf16.mxu0 0
        %873 = vmatpush1.bf16.msra.mxu0 %v830
        %874 = vmatprep.subr.bf16.mxu0 0
        %875 = vmatpush1.bf16.msra.mxu0 %v831
        %876 = vmatprep.subr.bf16.mxu0 0
        %877 = vmatpush1.bf16.msra.mxu0 %v832
        %878 = vmatprep.subr.bf16.mxu0 0
        %879 = vmatpush1.bf16.msra.mxu0 %v833
        %880 = vmatprep.subr.bf16.mxu0 0
        %881 = vmatpush1.bf16.msra.mxu0 %v834
        %882 = vmatprep.subr.bf16.mxu0 0
        %883 = vmatpush1.bf16.msra.mxu0 %v835
        %884 = vmatprep.mubr.bf16.mxu0 %v580
        %885 = vmatmul.mubr.bf16.gmra.mrb[0].mxu0 %v579
        %v886 = vpop.f32.mrb[0].mxu0
        %v887 = vadd.f32 %v755, %v886
        %v888 = vpop.f32.mrb[0].mxu0
        %v889 = vpop.f32.mrb[0].mxu0
        %v890 = vpop.f32.mrb[0].mxu0
        %891 = vdwg.mxu0
        %v892 = vld [vmem:[#allocation2] sm:$0xf]
        %v893 = vld [vmem:[%s441] sm:$0xf]
        %v894 = vld [vmem:[%s441 + $0x4] sm:$0xf]
        %v895 = vld [vmem:[%s441 + $0x8] sm:$0xf]
        %v896 = vld [vmem:[%s441 + $0xc] sm:$0xf]
        %v897 = vld [vmem:[%s441 + $0x10] sm:$0xf]
        %v898 = vld [vmem:[%s441 + $0x14] sm:$0xf]
        %v899 = vld [vmem:[%s441 + $0x18] sm:$0xf]
        %v900 = vld [vmem:[%s441 + $0x1c] sm:$0xf]
        %v901 = vld [vmem:[%s441 + $0x20] sm:$0xf]
        %v902 = vld [vmem:[%s441 + $0x24] sm:$0xf]
        %v903 = vld [vmem:[%s441 + $0x28] sm:$0xf]
        %v904 = vld [vmem:[%s441 + $0x2c] sm:$0xf]
        %v905 = vld [vmem:[%s441 + $0x30] sm:$0xf]
        %v906 = vld [vmem:[%s441 + $0x34] sm:$0xf]
        %v907 = vld [vmem:[%s441 + $0x38] sm:$0xf]
        %v908 = vld [vmem:[%s441 + $0x3c] sm:$0xf]
        %v909 = vld [vmem:[%s514 + $0x2] sm:$0x1]
        %v910 = vlaneseq
        %v911 = vshrl.u32 %v910, 7
        %v912 = vsub.s32 0, %v911
        %v913 = vrot.slane %v909, %v912
        %v930 = vunpack.c.l.b16 %v893
        %v931 = vunpack.c.l.b16 %v894
        %v932 = vunpack.c.l.b16 %v895
        %v933 = vunpack.c.l.b16 %v896
        %v934 = vunpack.c.l.b16 %v897
        %v935 = vunpack.c.l.b16 %v898
        %v936 = vunpack.c.l.b16 %v899
        %v937 = vunpack.c.l.b16 %v900
        %v938 = vunpack.c.l.b16 %v901
        %v939 = vunpack.c.l.b16 %v902
        %v940 = vunpack.c.l.b16 %v903
        %v941 = vunpack.c.l.b16 %v904
        %v942 = vunpack.c.l.b16 %v905
        %v943 = vunpack.c.l.b16 %v906
        %v944 = vunpack.c.l.b16 %v907
        %v945 = vunpack.c.l.b16 %v908
        %v946 = vpack.c.b16 %v931, %v930
        %v947 = vpack.c.b16 %v933, %v932
        %v948 = vpack.c.b16 %v935, %v934
        %v949 = vpack.c.b16 %v937, %v936
        %v950 = vpack.c.b16 %v939, %v938
        %v951 = vpack.c.b16 %v941, %v940
        %v952 = vpack.c.b16 %v943, %v942
        %v953 = vpack.c.b16 %v945, %v944
        %962 = vmatprep.subr.bf16.mxu0 0
        %963 = vmatpush1.bf16.msra.mxu0 %v946
        %964 = vmatprep.subr.bf16.mxu0 0
        %965 = vmatpush1.bf16.msra.mxu0 %v947
        %966 = vmatprep.subr.bf16.mxu0 0
        %967 = vmatpush1.bf16.msra.mxu0 %v948
        %968 = vmatprep.subr.bf16.mxu0 0
        %969 = vmatpush1.bf16.msra.mxu0 %v949
        %970 = vmatprep.subr.bf16.mxu0 0
        %971 = vmatpush1.bf16.msra.mxu0 %v950
        %972 = vmatprep.subr.bf16.mxu0 0
        %973 = vmatpush1.bf16.msra.mxu0 %v951
        %974 = vmatprep.subr.bf16.mxu0 0
        %975 = vmatpush1.bf16.msra.mxu0 %v952
        %976 = vmatprep.subr.bf16.mxu0 0
        %977 = vmatpush1.bf16.msra.mxu0 %v953
        %978 = vmatprep.subr.bf16.mxu0 0
        %979 = vmatpush1.bf16.msra.mxu0 0
        %980 = vmatprep.subr.bf16.mxu0 0
        %981 = vmatpush1.bf16.msra.mxu0 0
        %982 = vmatprep.subr.bf16.mxu0 0
        %983 = vmatpush1.bf16.msra.mxu0 0
        %984 = vmatprep.subr.bf16.mxu0 0
        %985 = vmatpush1.bf16.msra.mxu0 0
        %986 = vmatprep.subr.bf16.mxu0 0
        %987 = vmatpush1.bf16.msra.mxu0 0
        %988 = vmatprep.subr.bf16.mxu0 0
        %989 = vmatpush1.bf16.msra.mxu0 0
        %990 = vmatprep.subr.bf16.mxu0 0
        %991 = vmatpush1.bf16.msra.mxu0 0
        %992 = vmatprep.subr.bf16.mxu0 0
        %993 = vmatpush1.bf16.msra.mxu0 0
        %994 = vmatprep.mubr.bf16.mxu0 0
        %995 = vmatmul.mubr.bf16.gmra.mrb[0].mxu0 %v892
        %v996 = vpop.f32.mrb[0].mxu0
        %v997 = vadd.f32 %v913, %v996
        %v998 = vpop.f32.mrb[0].mxu0
        %v999 = vpop.f32.mrb[0].mxu0
        %v1000 = vpop.f32.mrb[0].mxu0
        %1001 = vdwg.mxu0
        %v1002 = vld [vmem:[#allocation2 + $0x4] sm:$0xf]
        %v1003 = vld [vmem:[%s450] sm:$0xf]
        %v1004 = vld [vmem:[%s450 + $0x4] sm:$0xf]
        %v1005 = vld [vmem:[%s450 + $0x8] sm:$0xf]
        %v1006 = vld [vmem:[%s450 + $0xc] sm:$0xf]
        %v1007 = vld [vmem:[%s450 + $0x10] sm:$0xf]
        %v1008 = vld [vmem:[%s450 + $0x14] sm:$0xf]
        %v1009 = vld [vmem:[%s450 + $0x18] sm:$0xf]
        %v1010 = vld [vmem:[%s450 + $0x1c] sm:$0xf]
        %v1011 = vld [vmem:[%s450 + $0x20] sm:$0xf]
        %v1012 = vld [vmem:[%s450 + $0x24] sm:$0xf]
        %v1013 = vld [vmem:[%s450 + $0x28] sm:$0xf]
        %v1014 = vld [vmem:[%s450 + $0x2c] sm:$0xf]
        %v1015 = vld [vmem:[%s450 + $0x30] sm:$0xf]
        %v1016 = vld [vmem:[%s450 + $0x34] sm:$0xf]
        %v1017 = vld [vmem:[%s450 + $0x38] sm:$0xf]
        %v1018 = vld [vmem:[%s450 + $0x3c] sm:$0xf]
        %v1019 = vld [vmem:[%s514 + $0x3] sm:$0x1]
        %v1020 = vlaneseq
        %v1021 = vshrl.u32 %v1020, 7
        %v1022 = vsub.s32 0, %v1021
        %v1023 = vrot.slane %v1019, %v1022
        %v1040 = vunpack.c.l.b16 %v1003
        %v1041 = vunpack.c.l.b16 %v1004
        %v1042 = vunpack.c.l.b16 %v1005
        %v1043 = vunpack.c.l.b16 %v1006
        %v1044 = vunpack.c.l.b16 %v1007
        %v1045 = vunpack.c.l.b16 %v1008
        %v1046 = vunpack.c.l.b16 %v1009
        %v1047 = vunpack.c.l.b16 %v1010
        %v1048 = vunpack.c.l.b16 %v1011
        %v1049 = vunpack.c.l.b16 %v1012
        %v1050 = vunpack.c.l.b16 %v1013
        %v1051 = vunpack.c.l.b16 %v1014
        %v1052 = vunpack.c.l.b16 %v1015
        %v1053 = vunpack.c.l.b16 %v1016
        %v1054 = vunpack.c.l.b16 %v1017
        %v1055 = vunpack.c.l.b16 %v1018
        %v1056 = vpack.c.b16 %v1041, %v1040
        %v1057 = vpack.c.b16 %v1043, %v1042
        %v1058 = vpack.c.b16 %v1045, %v1044
        %v1059 = vpack.c.b16 %v1047, %v1046
        %v1060 = vpack.c.b16 %v1049, %v1048
        %v1061 = vpack.c.b16 %v1051, %v1050
        %v1062 = vpack.c.b16 %v1053, %v1052
        %v1063 = vpack.c.b16 %v1055, %v1054
        %1072 = vmatprep.subr.bf16.mxu0 0
        %1073 = vmatpush1.bf16.msra.mxu0 %v1056
        %1074 = vmatprep.subr.bf16.mxu0 0
        %1075 = vmatpush1.bf16.msra.mxu0 %v1057
        %1076 = vmatprep.subr.bf16.mxu0 0
        %1077 = vmatpush1.bf16.msra.mxu0 %v1058
        %1078 = vmatprep.subr.bf16.mxu0 0
        %1079 = vmatpush1.bf16.msra.mxu0 %v1059
        %1080 = vmatprep.subr.bf16.mxu0 0
        %1081 = vmatpush1.bf16.msra.mxu0 %v1060
        %1082 = vmatprep.subr.bf16.mxu0 0
        %1083 = vmatpush1.bf16.msra.mxu0 %v1061
        %1084 = vmatprep.subr.bf16.mxu0 0
        %1085 = vmatpush1.bf16.msra.mxu0 %v1062
        %1086 = vmatprep.subr.bf16.mxu0 0
        %1087 = vmatpush1.bf16.msra.mxu0 %v1063
        %1088 = vmatprep.subr.bf16.mxu0 0
        %1089 = vmatpush1.bf16.msra.mxu0 0
        %1090 = vmatprep.subr.bf16.mxu0 0
        %1091 = vmatpush1.bf16.msra.mxu0 0
        %1092 = vmatprep.subr.bf16.mxu0 0
        %1093 = vmatpush1.bf16.msra.mxu0 0
        %1094 = vmatprep.subr.bf16.mxu0 0
        %1095 = vmatpush1.bf16.msra.mxu0 0
        %1096 = vmatprep.subr.bf16.mxu0 0
        %1097 = vmatpush1.bf16.msra.mxu0 0
        %1098 = vmatprep.subr.bf16.mxu0 0
        %1099 = vmatpush1.bf16.msra.mxu0 0
        %1100 = vmatprep.subr.bf16.mxu0 0
        %1101 = vmatpush1.bf16.msra.mxu0 0
        %1102 = vmatprep.subr.bf16.mxu0 0
        %1103 = vmatpush1.bf16.msra.mxu0 0
        %1104 = vmatprep.mubr.bf16.mxu0 0
        %1105 = vmatmul.mubr.bf16.gmra.mrb[0].mxu0 %v1002
        %v1106 = vpop.f32.mrb[0].mxu0
        %v1107 = vadd.f32 %v1023, %v1106
        %v1108 = vpop.f32.mrb[0].mxu0
        %v1109 = vpop.f32.mrb[0].mxu0
        %v1110 = vpop.f32.mrb[0].mxu0
        %1111 = vdwg.mxu0
        %v1112 = vxor.u32 %v714, 2147483648
        %v1113 = vmul.f32 %v1112, 1.442695
        %v1114 = vpow.pop %v1113
        %v1115 = vadd.f32 %v1114, 1.0
        %v1116 = vrcp.pop %v1115
        %v1117 = vmul.f32 1.0, %v1116
        %v1118 = vxor.u32 %v887, 2147483648
        %v1119 = vmul.f32 %v1118, 1.442695
        %v1120 = vpow.pop %v1119
        %v1121 = vadd.f32 %v1120, 1.0
        %v1122 = vrcp.pop %v1121
        %v1123 = vmul.f32 1.0, %v1122
        %v1124 = vmul.f32 %v1117, %v1107
        %v1125 = vadd.f32 %v997, %v1124
        %v1126 = vtanh.pop %v1125
        %s1127 = sshra.s32 %s516, 7
        %s1128 = sand.u32 %s516, 127
        %s1129 = scalar_lea.vmem %s414, %s1127 [#allocation7]
        %v1130 = vld [vmem:[%s1129] sm:$0xff]
        %v1131 = vsub.f32 1.0, %v1123
        %v1132 = vmul.f32 %v1131, %v1126
        %v1133 = vmul.f32 %v1123, %v1130
        %v1134 = vadd.f32 %v1132, %v1133
        %1135 = vst [vmem:[%s507] sm:$0xff] %v1134
        %v1136 = vpack.c.bf16 %v1134, %v1134
        %s1137 = smul.addr %s1127, 4
        %s1138 = scalar_lea.vmem [#allocation3], %s1137
        %1139 = vst [vmem:[%s1138] sm:$0xf] %v1136
        %s1140 = sand.u32 %s240, 1
        %s1141 = scalar_lea.sflag [#allocation6], %s1140
        %s1142 = sand.u32 %s240, 1
        %s1143 = smul.addr %s1142, 8
        %s1144 = scalar_lea.vmem [#allocation15], %s1143
        // Predicated region
        $region85: #{tpu_custom_call.1} parent=47 // pred_check
          %p1145 = pneg %p250
        $region86: #{tpu_custom_call.1} parent=47 // pred_check_branch
          %1147 = sbr.rel (%p1145) target = $region88
        $region87: #{tpu_custom_call.1} parent=47 // pred_region
          %s1149 = ssub.s32 128, 128
          %1150 = vsyncadd %s1141, %s1149
          %s1151 = sadd.s32 %s36, %s35
          %s1152 = smul.addr %s1151, 128
          %s1153 = scalar_lea.hbm %s7, %s1152
          %s1155 = sshll.u32 %s1144, 4
          %s1156 = int_to_ptr.vmem [resolvable:$true] %s1155
          %1158 = dma.vmem_to_hbm [thread:$0]  %s1156, 128, %s1153, %s1141
        $region88: #{tpu_custom_call.1} parent=47 // pred_fallthru
          _
      $region48: #{tpu_custom_call.1} parent=5 // pred_fallthru
        _
      %p1159 = scmp.le.s32.totalorder 2, %s26
      // Predicated region
      $region89: #{tpu_custom_call.1} parent=5 // pred_check
        %p1160 = pneg %p1159
      $region90: #{tpu_custom_call.1} parent=5 // pred_check_branch
        %1162 = sbr.rel (%p1160) target = $region92
      $region91: #{tpu_custom_call.1} parent=5 // pred_region
        %s1163 = ssub.s32 %s26, 2
        // Predicated region
        $region93: #{tpu_custom_call.1} parent=91 // pred_check
          %p1164 = pneg %p256
        $region94: #{tpu_custom_call.1} parent=91 // pred_check_branch
          %1166 = sbr.rel (%p1164) target = $region96
        $region95: #{tpu_custom_call.1} parent=91 // pred_region
          %s1167 = sand.u32 %s241, 1
          %s1168 = scalar_lea.sflag [#allocation6], %s1167
          %s1169 = sand.u32 %s241, 1
          %s1170 = smul.addr %s1169, 8
          %s1171 = scalar_lea.vmem [#allocation15], %s1170
          %1172 = dma.done %s1168, 128
        $region96: #{tpu_custom_call.1} parent=91 // pred_fallthru
          _
      $region92: #{tpu_custom_call.1} parent=5 // pred_fallthru
        _
    $region6: #{tpu_custom_call.1} parent=1 // loop_footer
      %s30 = sadd.s32 1, %s26
    $region7: #{tpu_custom_call.1} parent=1 // loop_footer_branch
      %25 = sbr.rel target = $region3
    $region8: #{tpu_custom_call.1} parent=1 // loop_exit
      _
    %1173 = vsyncpa [#allocation5], 1
    %s1174 = scalar_lea.sflag [#allocation5], 1
    %1175 = vsyncpa %s1174, 1
    %1176 = vsyncpa [#allocation8], 1
    %s1177 = scalar_lea.sflag [#allocation8], 1
    %1178 = vsyncpa %s1177, 1
    %1179 = vsyncpa [#allocation11], 1
    %s1180 = scalar_lea.sflag [#allocation11], 1
    %1181 = vsyncpa %s1180, 1
    %1182 = vsyncpa [#allocation14], 1
    %s1183 = scalar_lea.sflag [#allocation14], 1
    %1184 = vsyncpa %s1183, 1
    %1185 = vsyncpa [#allocation6], 1
    %s1186 = scalar_lea.sflag [#allocation6], 1
    %1187 = vsyncpa %s1186, 1

</llo_original>
